<compile_context>
chip_gen: v5e
topology: v5e:2x2
jax: 0.10.0
libtpu: 0.0.40
codegen_flags: <defaults>
</compile_context>

<pallas_src>
import jax
import jax.numpy as jnp
from jax.experimental import pallas as pl
from jax.experimental.pallas import tpu as pltpu


# ------------------------------ Pallas kernel --------------------------------
def al_encoder_kernel(idx_ref,        # [TE, 2] int32  (lane index, actor index)
                      edge_attr_ref,  # [TE, A]
                      lane_vec_ref,   # [L, 2]
                      v_enc_ref,      # [V, D]
                      rot_ref,        # [V, 4]  rotate_imat flattened row-major
                      emb_ref,        # [5, D]  rows: W_emb(2) | b_emb | gamma | beta
                      big_w_ref,      # [2D+H, D*H] rows: W_all | W_out | rep
                      score_ref,      # [H, 2D+A]   rows h: W_h@a_lane | W_h@a_act | a_edge
                      out_ref,        # [V, D]
                      m_scr,          # [1, H]   running per-head max
                      d_scr,          # [V, H]   softmax denominator (scattered)
                      acc_scr,        # [V, DH]  un-normalized aggregation
                      act_scr):       # [V, H]   per-actor score contribution
    f32 = jnp.float32
    TE = idx_ref.shape[0]
    A = edge_attr_ref.shape[1]
    L = lane_vec_ref.shape[0]
    V, D = v_enc_ref.shape
    H = score_ref.shape[0]
    DH = D * H

    t = pl.program_id(0)

    w_all = big_w_ref[0:D, :]                 # [D, DH]  per-head W (math [in,out])
    rep = big_w_ref[2 * D:2 * D + H, :]       # [H, DH]  head -> feature-block broadcast

    @pl.when(t == 0)
    def _init():
        m_scr[...] = jnp.full_like(m_scr, -jnp.inf)
        d_scr[...] = jnp.zeros_like(d_scr)
        acc_scr[...] = jnp.zeros_like(acc_scr)
        # per-actor attention-score term: v_enc @ (W_h @ a_h[D:2D]) for all heads
        act_scr[...] = jax.lax.dot_general(
            v_enc_ref[...], score_ref[:, D:2 * D],
            (((1,), (1,)), ((), ())), preferred_element_type=f32)        # [V, H]

    # ---- one-hot matrices built in-register (gather/scatter via MXU) --------
    idx = idx_ref[...]
    lane_col = idx[:, 0:1]
    actor_col = idx[:, 1:2]
    lane_oh = (jax.lax.broadcasted_iota(jnp.int32, (TE, L), 1)
               == lane_col).astype(f32)                                  # [TE, L]
    veh_oh = (jax.lax.broadcasted_iota(jnp.int32, (TE, V), 1)
              == actor_col).astype(f32)                                  # [TE, V]

    # ---- per-edge rotated lane vectors: (1x2) @ (2x2) ------------------------
    lane_g = jnp.dot(lane_oh, lane_vec_ref[...], preferred_element_type=f32)   # [TE, 2]
    rot_g = jnp.dot(veh_oh, rot_ref[...], preferred_element_type=f32)          # [TE, 4]
    lx, ly = lane_g[:, 0:1], lane_g[:, 1:2]
    rx = lx * rot_g[:, 0:1] + ly * rot_g[:, 2:3]
    ry = lx * rot_g[:, 1:2] + ly * rot_g[:, 3:4]

    # ---- lane_emb MLP: Linear(2,D) -> LayerNorm(D) -> ReLU (two-pass var) ----
    z = rx * emb_ref[0:1, :] + ry * emb_ref[1:2, :] + emb_ref[2:3, :]          # [TE, D]
    mu = jnp.mean(z, axis=-1, keepdims=True)
    zc = z - mu
    var = jnp.mean(zc * zc, axis=-1, keepdims=True)
    lane_enc = jnp.maximum(
        zc * jax.lax.rsqrt(var + 1e-5) * emb_ref[3:4, :] + emb_ref[4:5, :], 0.0)

    # ---- fused multi-head scores --------------------------------------------
    h_lane = jnp.dot(lane_enc, w_all, preferred_element_type=f32)              # [TE, DH]
    s = (jax.lax.dot_general(lane_enc, score_ref[:, 0:D],
                             (((1,), (1,)), ((), ())), preferred_element_type=f32)
         + jnp.dot(veh_oh, act_scr[...], preferred_element_type=f32)
         + jax.lax.dot_general(edge_attr_ref[...], score_ref[:, 2 * D:2 * D + A],
                               (((1,), (1,)), ((), ())),
                               preferred_element_type=f32))                    # [TE, H]
    s = jnp.where(s >= 0.0, s, 0.01 * s)                 # LeakyReLU(0.01)

    # ---- flash-style running max + rescaled accumulators over edge tiles -----
    m_old = m_scr[...]
    m_new = jnp.maximum(m_old, jnp.max(s, axis=0, keepdims=True))              # [1, H]
    scale = jnp.exp(m_old - m_new)                                             # [1, H]
    p = jnp.exp(s - m_new)                                                     # [TE, H]

    # scatter-add via transposed one-hot (contract over the edge-tile dim)
    d_scr[...] = d_scr[...] * scale + jax.lax.dot_general(
        veh_oh, p, (((0,), (0,)), ((), ())), preferred_element_type=f32)       # [V, H]
    attn_w = jnp.dot(p, rep, preferred_element_type=f32)                       # [TE, DH]
    acc_scr[...] = (acc_scr[...] * jnp.dot(scale, rep, preferred_element_type=f32)
                    + jax.lax.dot_general(veh_oh, h_lane * attn_w,
                                          (((0,), (0,)), ((), ())),
                                          preferred_element_type=f32))         # [V, DH]
    m_scr[...] = m_new

    @pl.when(t == pl.num_programs(0) - 1)
    def _finalize():
        w_out = big_w_ref[D:2 * D, :]                   # [D, DH] PyTorch [out, in]
        denom = jnp.dot(d_scr[...], rep, preferred_element_type=f32) + 1e-16   # [V, DH]
        o = acc_scr[...] / denom

        def elu(x):
            return jnp.where(x > 0.0, x, jnp.exp(jnp.minimum(x, 0.0)) - 1.0)

        o = elu(elu(o))                 # per-head ELU (in layer) + post-concat ELU
        # out_transform: Linear(D*H, D, bias=False), weight in [out, in] layout
        out_ref[...] = jax.lax.dot_general(
            o, w_out, (((1,), (1,)), ((), ())), preferred_element_type=f32)    # [V, D]


# -------------------------------- Wrapper ------------------------------------
def al_encoder_forward(lane_vectors, lane_actor_index, rotate_imat,
                       lane_actor_vectors, v_enc, params, *, num_heads,
                       edge_tile=8):
    V, D = v_enc.shape
    L = lane_vectors.shape[0]
    E = lane_actor_index.shape[1]
    A = lane_actor_vectors.shape[1]
    H = num_heads

    TE = edge_tile
    n_tiles = pl.cdiv(E, TE)
    E_pad = n_tiles * TE
    pad = E_pad - E

    lane_idx = lane_actor_index[0].astype(jnp.int32)
    actor_idx = lane_actor_index[1].astype(jnp.int32)
    idx = jnp.stack([lane_idx, actor_idx], axis=1)              # [E, 2] single slab
    edge_attr = lane_actor_vectors.astype(jnp.float32)          # [E, A]
    if pad:
        # Dummy edges: actor index == V (out of range) -> all-zero one-hot row
        # -> contributes nothing to any scatter-add or denominator.
        pad_idx = jnp.concatenate(
            [jnp.zeros((pad, 1), jnp.int32), jnp.full((pad, 1), V, jnp.int32)],
            axis=1)
        idx = jnp.concatenate([idx, pad_idx], axis=0)
        edge_attr = jnp.concatenate(
            [edge_attr, jnp.zeros((pad, A), jnp.float32)], axis=0)

    args = (
        idx,                                               # [E_pad, 2] int32
        edge_attr,                                         # [E_pad, A]
        lane_vectors.astype(jnp.float32),                  # [L, 2]
        v_enc.astype(jnp.float32),                         # [V, D]
        rotate_imat.reshape(V, 4).astype(jnp.float32),     # [V, 4]
        params["emb_pack"],                                # [5, D]
        params["big_w"],                                   # [2D+H, D*H]
        params["score_pack"],                              # [H, 2D+A]
    )

    def resident(a):   # full-array block, same block index every grid step
        return pl.BlockSpec(a.shape, lambda t: (0,) * a.ndim)

    in_specs = [
        pl.BlockSpec((TE, 2), lambda t: (t, 0)),           # edge index tile
        pl.BlockSpec((TE, A), lambda t: (t, 0)),           # edge attr tile
        resident(args[2]), resident(args[3]), resident(args[4]),
        resident(args[5]), resident(args[6]), resident(args[7]),
    ]

    out = pl.pallas_call(
        al_encoder_kernel,
        out_shape=jax.ShapeDtypeStruct((V, D), jnp.float32),
        grid=(n_tiles,),
        in_specs=in_specs,
        out_specs=pl.BlockSpec((V, D), lambda t: (0, 0)),
        scratch_shapes=[
            pltpu.VMEM((1, H), jnp.float32),        # running per-head max
            pltpu.VMEM((V, H), jnp.float32),        # softmax denominator
            pltpu.VMEM((V, D * H), jnp.float32),    # un-normalized aggregation
            pltpu.VMEM((V, H), jnp.float32),        # per-actor score term
        ],
        compiler_params=pltpu.CompilerParams(
            dimension_semantics=("arbitrary",),     # edge axis is a reduction
            # 32 MiB is plenty here; per-generation: v5e/v6e can go higher,
            # v7x should stay <= ~48-56 MiB usable.
            vmem_limit_bytes=32 << 20),
    )(*args)
    return out


# ----------------------------- Parameter init ---------------------------------
def init_params(key, out_dim, num_heads, lane_dim, edge_attr_dim):
    D, H, A = out_dim, num_heads, edge_attr_dim
    DH = D * H
    ks = jax.random.split(key, 3 + 2 * H)

    def uni(k, shape, fan_in):
        bound = 1.0 / jnp.sqrt(fan_in)
        return jax.random.uniform(k, shape, jnp.float32, -bound, bound)

    # lane_emb MLP: Linear(lane_dim, D) -> LayerNorm(D) -> ReLU
    w_emb = uni(ks[0], (lane_dim, D), lane_dim)
    b_emb = uni(ks[1], (D,), lane_dim)
    gamma = jnp.ones((D,), jnp.float32)
    beta = jnp.zeros((D,), jnp.float32)

    per_head = []
    for h in range(H):
        W = uni(ks[3 + 2 * h], (D, D), D)                        # math layout [in, out]
        a = uni(ks[4 + 2 * h], (2 * D + A, 1), 2 * D + A)
        per_head.append((W, a))

    w_out = uni(ks[2], (D, DH), DH)                              # PyTorch [out, in]

    # ---- packed kernel operands (few big, lane-dense DMAs) ------------------
    emb_pack = jnp.concatenate([w_emb, b_emb[None], gamma[None], beta[None]], axis=0)

    w_all = jnp.concatenate([W for W, _ in per_head], axis=1)    # [D, DH]
    rep = jnp.zeros((H, DH), jnp.float32)                        # precomputed broadcast
    for h in range(H):
        rep = rep.at[h, h * D:(h + 1) * D].set(1.0)
    big_w = jnp.concatenate([w_all, w_out, rep], axis=0)         # [2D+H, DH]

    # Fold attention vectors into the projections: row h = W_h @ a_h[...]
    wa_lane = jnp.stack([per_head[h][0] @ per_head[h][1][:D, 0] for h in range(H)], axis=0)
    wa_act = jnp.stack([per_head[h][0] @ per_head[h][1][D:2 * D, 0] for h in range(H)], axis=0)
    a_edge = jnp.stack([per_head[h][1][2 * D:, 0] for h in range(H)], axis=0)
    score_pack = jnp.concatenate([wa_lane, wa_act, a_edge], axis=1)   # [H, 2D+A]

    params = {"emb_pack": emb_pack, "big_w": big_w, "score_pack": score_pack}
    emb = {"w": w_emb, "b": b_emb, "g": gamma, "beta": beta}
    return params, per_head, emb, w_out


# ---------------------------- Pure-JAX reference ------------------------------
def reference_forward(lane_vectors, lane_actor_index, rotate_imat,
                      lane_actor_vectors, v_enc, per_head, emb, w_out, num_heads):
    with jax.default_matmul_precision("float32"):
        lane_idx = lane_actor_index[0]
        actor_idx = lane_actor_index[1]
        V, D = v_enc.shape

        lane_g = lane_vectors[lane_idx]                                # [E, 2]
        R = rotate_imat[actor_idx]                                     # [E, 2, 2]
        lane_rot = jnp.einsum("ei,eij->ej", lane_g, R)                 # bmm (1x2)@(2x2)

        z = lane_rot @ emb["w"] + emb["b"]
        mu = z.mean(-1, keepdims=True)
        var = ((z - mu) ** 2).mean(-1, keepdims=True)
        lane_enc = jnp.maximum(
            (z - mu) / jnp.sqrt(var + 1e-5) * emb["g"] + emb["beta"], 0.0)

        x = jnp.concatenate([v_enc, lane_enc], axis=0)                 # [V+E, D]
        outs = []
        for hh in range(num_heads):
            W, a = per_head[hh]
            h = x @ W
            h_lane = h[V:]
            h_tgt = h[:V][actor_idx]
            attn_in = jnp.concatenate([h_lane, h_tgt, lane_actor_vectors], axis=1)
            s = (attn_in @ a)[:, 0]
            s = jnp.where(s >= 0.0, s, 0.01 * s)
            s = s - s.max()
            es = jnp.exp(s)
            den = jnp.zeros((V,), jnp.float32).at[actor_idx].add(es)
            attn = es / (den[actor_idx] + 1e-16)
            o = jnp.zeros((V, D), jnp.float32).at[actor_idx].add(h_lane * attn[:, None])
            outs.append(jax.nn.elu(o))
        out = jax.nn.elu(jnp.concatenate(outs, axis=1))
        return out @ w_out.T


if __name__ == "__main__":
    # Small, module-consistent shapes (exercises the edge-tile padding path).
    V = 8            # num_nodes (vehicles)
    L = 16           # number of lane vectors
    E = 28           # number of lane-actor edges (not a multiple of the tile)
    D = 32           # out_dim
    H = 2            # num_heads
    lane_dim = 2
    edge_attr_dim = 2

    key = jax.random.PRNGKey(0)
    ks = jax.random.split(key, 7)
    lane_vectors = jax.random.normal(ks[0], (L, lane_dim), jnp.float32)
    v_enc = jax.random.normal(ks[1], (V, D), jnp.float32)
    angles = jax.random.uniform(ks[2], (V,), jnp.float32, 0.0, 2.0 * jnp.pi)
    c, s = jnp.cos(angles), jnp.sin(angles)
    rotate_imat = jnp.stack(
        [jnp.stack([c, -s], axis=-1), jnp.stack([s, c], axis=-1)], axis=-2)   # [V, 2, 2]
    lane_actor_vectors = jax.random.normal(ks[3], (E, edge_attr_dim), jnp.float32)
    lane_idx = jax.random.randint(ks[4], (E,), 0, L, jnp.int32)
    actor_idx = jax.random.randint(ks[5], (E,), 0, V, jnp.int32)
    lane_actor_index = jnp.stack([lane_idx, actor_idx], axis=0)

    params, per_head, emb, w_out = init_params(ks[6], D, H, lane_dim, edge_attr_dim)

    out = al_encoder_forward(
        lane_vectors, lane_actor_index, rotate_imat, lane_actor_vectors, v_enc,
        params, num_heads=H, edge_tile=8)
    jax.block_until_ready(out)

    ref = reference_forward(
        lane_vectors, lane_actor_index, rotate_imat, lane_actor_vectors, v_enc,
        per_head, emb, w_out, H)

    assert out.shape == (V, D)
    assert jnp.allclose(out, ref, atol=1e-4, rtol=1e-4)

    print("KERNEL_OK")
</pallas_src>

<mosaic_0001>
module attributes {stable_mosaic.version = 11 : i64} {
  func.func @al_encoder_kernel(%arg0: i32, %arg1: memref<8x2xi32, #tpu.memory_space<vmem>>, %arg2: memref<8x2xf32, #tpu.memory_space<vmem>>, %arg3: memref<16x2xf32, #tpu.memory_space<vmem>>, %arg4: memref<8x32xf32, #tpu.memory_space<vmem>>, %arg5: memref<8x4xf32, #tpu.memory_space<vmem>>, %arg6: memref<5x32xf32, #tpu.memory_space<vmem>>, %arg7: memref<66x64xf32, #tpu.memory_space<vmem>>, %arg8: memref<2x66xf32, #tpu.memory_space<vmem>>, %arg9: memref<8x32xf32, #tpu.memory_space<vmem>>, %arg10: memref<1x2xf32, #tpu.memory_space<vmem>>, %arg11: memref<8x2xf32, #tpu.memory_space<vmem>>, %arg12: memref<8x64xf32, #tpu.memory_space<vmem>>, %arg13: memref<8x2xf32, #tpu.memory_space<vmem>>) attributes {dimension_semantics = [#tpu.dimension_semantics<arbitrary>], iteration_bounds = array<i64: 4>, scalar_prefetch = 0 : i64, scratch_operands = 4 : i64, tpu.core_type = #tpu.core_type<tc>, window_params = [{transform_indices = @transform_0, window_bounds = array<i64: 8, 2>}, {transform_indices = @transform_1, window_bounds = array<i64: 8, 2>}, {pipeline_mode = #tpu.pipeline_mode<synchronous>, transform_indices = @transform_2, window_bounds = array<i64: 16, 2>}, {pipeline_mode = #tpu.pipeline_mode<synchronous>, transform_indices = @transform_3, window_bounds = array<i64: 8, 32>}, {pipeline_mode = #tpu.pipeline_mode<synchronous>, transform_indices = @transform_4, window_bounds = array<i64: 8, 4>}, {pipeline_mode = #tpu.pipeline_mode<synchronous>, transform_indices = @transform_5, window_bounds = array<i64: 5, 32>}, {pipeline_mode = #tpu.pipeline_mode<synchronous>, transform_indices = @transform_6, window_bounds = array<i64: 66, 64>}, {pipeline_mode = #tpu.pipeline_mode<synchronous>, transform_indices = @transform_7, window_bounds = array<i64: 2, 66>}, {pipeline_mode = #tpu.pipeline_mode<synchronous>, transform_indices = @transform_8, window_bounds = array<i64: 8, 32>}]} {
    %c0 = arith.constant 0 : index
    %c0_0 = arith.constant 0 : index
    %0 = vector.load %arg7[%c0, %c0_0] : memref<66x64xf32, #tpu.memory_space<vmem>>, vector<32x64xf32>
    %c64 = arith.constant 64 : index
    %c0_1 = arith.constant 0 : index
    %1 = vector.load %arg7[%c64, %c0_1] : memref<66x64xf32, #tpu.memory_space<vmem>>, vector<2x64xf32>
    %c0_i32 = arith.constant 0 : i32
    %2 = arith.cmpi eq, %arg0, %c0_i32 : i32
    %3 = arith.extui %2 : i1 to i32
    %c0_i32_2 = arith.constant 0 : i32
    %4 = arith.cmpi ne, %3, %c0_i32_2 : i32
    scf.if %4 {
      %cst_54 = arith.constant 0xFF800000 : f32
      %113 = vector.broadcast %cst_54 : f32 to vector<1x2xf32>
      %c0_55 = arith.constant 0 : index
      %c0_56 = arith.constant 0 : index
      %114 = vector.load %arg10[%c0_55, %c0_56] : memref<1x2xf32, #tpu.memory_space<vmem>>, vector<1x2xf32>
      tpu.vector_store %arg10[%c0_55, %c0_56], %113 {strides = array<i32>} : memref<1x2xf32, #tpu.memory_space<vmem>>, vector<1x2xf32>,
      %cst_57 = arith.constant 0.000000e+00 : f32
      %115 = vector.broadcast %cst_57 : f32 to vector<8x2xf32>
      %c0_58 = arith.constant 0 : index
      %c0_59 = arith.constant 0 : index
      %116 = vector.load %arg11[%c0_58, %c0_59] : memref<8x2xf32, #tpu.memory_space<vmem>>, vector<8x2xf32>
      tpu.vector_store %arg11[%c0_58, %c0_59], %115 {strides = array<i32>} : memref<8x2xf32, #tpu.memory_space<vmem>>, vector<8x2xf32>,
      %cst_60 = arith.constant 0.000000e+00 : f32
      %117 = vector.broadcast %cst_60 : f32 to vector<8x64xf32>
      %c0_61 = arith.constant 0 : index
      %c0_62 = arith.constant 0 : index
      %118 = vector.load %arg12[%c0_61, %c0_62] : memref<8x64xf32, #tpu.memory_space<vmem>>, vector<8x64xf32>
      tpu.vector_store %arg12[%c0_61, %c0_62], %117 {strides = array<i32>} : memref<8x64xf32, #tpu.memory_space<vmem>>, vector<8x64xf32>,
      %c0_63 = arith.constant 0 : index
      %c0_64 = arith.constant 0 : index
      %119 = vector.load %arg4[%c0_63, %c0_64] : memref<8x32xf32, #tpu.memory_space<vmem>>, vector<8x32xf32>
      %c0_65 = arith.constant 0 : index
      %c32 = arith.constant 32 : index
      %120 = vector.load %arg8[%c0_65, %c32] : memref<2x66xf32, #tpu.memory_space<vmem>>, vector<2x32xf32>
      %cst_66 = arith.constant dense<0.000000e+00> : vector<8x2xf32>
      %121 = tpu.matmul %119, %120, %cst_66 {dimension_numbers = #tpu.dot_dimension_numbers<[1], [1], [0], [0], [0, 0, 1, 0], [], []>} : vector<8x32xf32>, vector<2x32xf32>, vector<8x2xf32> -> vector<8x2xf32>
      %c0_67 = arith.constant 0 : index
      %c0_68 = arith.constant 0 : index
      %122 = vector.load %arg13[%c0_67, %c0_68] : memref<8x2xf32, #tpu.memory_space<vmem>>, vector<8x2xf32>
      tpu.vector_store %arg13[%c0_67, %c0_68], %121 {strides = array<i32>} : memref<8x2xf32, #tpu.memory_space<vmem>>, vector<8x2xf32>,
    } else {
    }
    %c0_3 = arith.constant 0 : index
    %c0_4 = arith.constant 0 : index
    %5 = vector.load %arg1[%c0_3, %c0_4] : memref<8x2xi32, #tpu.memory_space<vmem>>, vector<8x2xi32>
    %6 = vector.extract_strided_slice %5 {offsets = [0, 0], sizes = [8, 1], strides = [1, 1]} : vector<8x2xi32> to vector<8x1xi32>
    %7 = vector.extract_strided_slice %5 {offsets = [0, 1], sizes = [8, 1], strides = [1, 1]} : vector<8x2xi32> to vector<8x1xi32>
    %8 = tpu.iota {dimensions = array<i32: 1>} : vector<8x16xi32>
    %9 = vector.broadcast %6 : vector<8x1xi32> to vector<8x16xi32>
    %10 = arith.cmpi eq, %8, %9 : vector<8x16xi32>
    %11 = arith.extui %10 : vector<8x16xi1> to vector<8x16xi32>
    %12 = arith.sitofp %11 : vector<8x16xi32> to vector<8x16xf32>
    %13 = tpu.iota {dimensions = array<i32: 1>} : vector<8x8xi32>
    %14 = vector.broadcast %7 : vector<8x1xi32> to vector<8x8xi32>
    %15 = arith.cmpi eq, %13, %14 : vector<8x8xi32>
    %16 = arith.extui %15 : vector<8x8xi1> to vector<8x8xi32>
    %17 = arith.sitofp %16 : vector<8x8xi32> to vector<8x8xf32>
    %c0_5 = arith.constant 0 : index
    %c0_6 = arith.constant 0 : index
    %18 = vector.load %arg3[%c0_5, %c0_6] : memref<16x2xf32, #tpu.memory_space<vmem>>, vector<16x2xf32>
    %cst = arith.constant dense<0.000000e+00> : vector<8x2xf32>
    %19 = tpu.matmul %12, %18, %cst {dimension_numbers = #tpu.dot_dimension_numbers<[1], [0], [0], [1], [0, 0, 1, 1], [], []>} : vector<8x16xf32>, vector<16x2xf32>, vector<8x2xf32> -> vector<8x2xf32>
    %c0_7 = arith.constant 0 : index
    %c0_8 = arith.constant 0 : index
    %20 = vector.load %arg5[%c0_7, %c0_8] : memref<8x4xf32, #tpu.memory_space<vmem>>, vector<8x4xf32>
    %cst_9 = arith.constant dense<0.000000e+00> : vector<8x4xf32>
    %21 = tpu.matmul %17, %20, %cst_9 {dimension_numbers = #tpu.dot_dimension_numbers<[1], [0], [0], [1], [0, 0, 1, 1], [], []>} : vector<8x8xf32>, vector<8x4xf32>, vector<8x4xf32> -> vector<8x4xf32>
    %22 = vector.extract_strided_slice %19 {offsets = [0, 0], sizes = [8, 1], strides = [1, 1]} : vector<8x2xf32> to vector<8x1xf32>
    %23 = vector.extract_strided_slice %19 {offsets = [0, 1], sizes = [8, 1], strides = [1, 1]} : vector<8x2xf32> to vector<8x1xf32>
    %24 = vector.extract_strided_slice %21 {offsets = [0, 0], sizes = [8, 1], strides = [1, 1]} : vector<8x4xf32> to vector<8x1xf32>
    %25 = arith.mulf %22, %24 : vector<8x1xf32>
    %26 = vector.extract_strided_slice %21 {offsets = [0, 2], sizes = [8, 1], strides = [1, 1]} : vector<8x4xf32> to vector<8x1xf32>
    %27 = arith.mulf %23, %26 : vector<8x1xf32>
    %28 = arith.addf %25, %27 : vector<8x1xf32>
    %29 = vector.extract_strided_slice %21 {offsets = [0, 1], sizes = [8, 1], strides = [1, 1]} : vector<8x4xf32> to vector<8x1xf32>
    %30 = arith.mulf %22, %29 : vector<8x1xf32>
    %31 = vector.extract_strided_slice %21 {offsets = [0, 3], sizes = [8, 1], strides = [1, 1]} : vector<8x4xf32> to vector<8x1xf32>
    %32 = arith.mulf %23, %31 : vector<8x1xf32>
    %33 = arith.addf %30, %32 : vector<8x1xf32>
    %c0_10 = arith.constant 0 : index
    %c0_11 = arith.constant 0 : index
    %34 = vector.load %arg6[%c0_10, %c0_11] : memref<5x32xf32, #tpu.memory_space<vmem>>, vector<1x32xf32>
    %35 = vector.broadcast %28 : vector<8x1xf32> to vector<8x32xf32>
    %36 = vector.broadcast %34 : vector<1x32xf32> to vector<8x32xf32>
    %37 = arith.mulf %35, %36 : vector<8x32xf32>
    %c1 = arith.constant 1 : index
    %c0_12 = arith.constant 0 : index
    %38 = vector.load %arg6[%c1, %c0_12] : memref<5x32xf32, #tpu.memory_space<vmem>>, vector<1x32xf32>
    %39 = vector.broadcast %33 : vector<8x1xf32> to vector<8x32xf32>
    %40 = vector.broadcast %38 : vector<1x32xf32> to vector<8x32xf32>
    %41 = arith.mulf %39, %40 : vector<8x32xf32>
    %42 = arith.addf %37, %41 : vector<8x32xf32>
    %c2 = arith.constant 2 : index
    %c0_13 = arith.constant 0 : index
    %43 = vector.load %arg6[%c2, %c0_13] : memref<5x32xf32, #tpu.memory_space<vmem>>, vector<1x32xf32>
    %44 = vector.broadcast %43 : vector<1x32xf32> to vector<8x32xf32>
    %45 = arith.addf %42, %44 : vector<8x32xf32>
    %cst_14 = arith.constant dense<0.000000e+00> : vector<8xf32>
    %46 = vector.multi_reduction <add>, %45, %cst_14 [1] : vector<8x32xf32> to vector<8xf32>
    %47 = vector.shape_cast %46 : vector<8xf32> to vector<8x1xf32>
    %cst_15 = arith.constant 3.200000e+01 : f32
    %48 = vector.broadcast %cst_15 : f32 to vector<8x1xf32>
    %49 = arith.divf %47, %48 : vector<8x1xf32>
    %50 = vector.broadcast %49 : vector<8x1xf32> to vector<8x32xf32>
    %51 = arith.subf %45, %50 : vector<8x32xf32>
    %52 = arith.mulf %51, %51 : vector<8x32xf32>
    %cst_16 = arith.constant dense<0.000000e+00> : vector<8xf32>
    %53 = vector.multi_reduction <add>, %52, %cst_16 [1] : vector<8x32xf32> to vector<8xf32>
    %54 = vector.shape_cast %53 : vector<8xf32> to vector<8x1xf32>
    %cst_17 = arith.constant 3.200000e+01 : f32
    %55 = vector.broadcast %cst_17 : f32 to vector<8x1xf32>
    %56 = arith.divf %54, %55 : vector<8x1xf32>
    %cst_18 = arith.constant 9.99999974E-6 : f32
    %57 = vector.broadcast %cst_18 : f32 to vector<8x1xf32>
    %58 = arith.addf %56, %57 : vector<8x1xf32>
    %59 = math.rsqrt %58 : vector<8x1xf32>
    %60 = vector.broadcast %59 : vector<8x1xf32> to vector<8x32xf32>
    %61 = arith.mulf %51, %60 : vector<8x32xf32>
    %c3 = arith.constant 3 : index
    %c0_19 = arith.constant 0 : index
    %62 = vector.load %arg6[%c3, %c0_19] : memref<5x32xf32, #tpu.memory_space<vmem>>, vector<1x32xf32>
    %63 = vector.broadcast %62 : vector<1x32xf32> to vector<8x32xf32>
    %64 = arith.mulf %61, %63 : vector<8x32xf32>
    %c4 = arith.constant 4 : index
    %c0_20 = arith.constant 0 : index
    %65 = vector.load %arg6[%c4, %c0_20] : memref<5x32xf32, #tpu.memory_space<vmem>>, vector<1x32xf32>
    %66 = vector.broadcast %65 : vector<1x32xf32> to vector<8x32xf32>
    %67 = arith.addf %64, %66 : vector<8x32xf32>
    %cst_21 = arith.constant 0.000000e+00 : f32
    %68 = vector.broadcast %cst_21 : f32 to vector<8x32xf32>
    %69 = arith.maximumf %67, %68 : vector<8x32xf32>
    %cst_22 = arith.constant dense<0.000000e+00> : vector<8x64xf32>
    %70 = tpu.matmul %69, %0, %cst_22 {dimension_numbers = #tpu.dot_dimension_numbers<[1], [0], [0], [1], [0, 0, 1, 1], [], []>} : vector<8x32xf32>, vector<32x64xf32>, vector<8x64xf32> -> vector<8x64xf32>
    %c0_23 = arith.constant 0 : index
    %c0_24 = arith.constant 0 : index
    %71 = vector.load %arg8[%c0_23, %c0_24] : memref<2x66xf32, #tpu.memory_space<vmem>>, vector<2x32xf32>
    %cst_25 = arith.constant dense<0.000000e+00> : vector<8x2xf32>
    %72 = tpu.matmul %69, %71, %cst_25 {dimension_numbers = #tpu.dot_dimension_numbers<[1], [1], [0], [0], [0, 0, 1, 0], [], []>} : vector<8x32xf32>, vector<2x32xf32>, vector<8x2xf32> -> vector<8x2xf32>
    %c0_26 = arith.constant 0 : index
    %c0_27 = arith.constant 0 : index
    %73 = vector.load %arg13[%c0_26, %c0_27] : memref<8x2xf32, #tpu.memory_space<vmem>>, vector<8x2xf32>
    %cst_28 = arith.constant dense<0.000000e+00> : vector<8x2xf32>
    %74 = tpu.matmul %17, %73, %cst_28 {dimension_numbers = #tpu.dot_dimension_numbers<[1], [0], [0], [1], [0, 0, 1, 1], [], []>} : vector<8x8xf32>, vector<8x2xf32>, vector<8x2xf32> -> vector<8x2xf32>
    %75 = arith.addf %72, %74 : vector<8x2xf32>
    %c0_29 = arith.constant 0 : index
    %c0_30 = arith.constant 0 : index
    %76 = vector.load %arg2[%c0_29, %c0_30] : memref<8x2xf32, #tpu.memory_space<vmem>>, vector<8x2xf32>
    %c0_31 = arith.constant 0 : index
    %c64_32 = arith.constant 64 : index
    %77 = vector.load %arg8[%c0_31, %c64_32] : memref<2x66xf32, #tpu.memory_space<vmem>>, vector<2x2xf32>
    %cst_33 = arith.constant dense<0.000000e+00> : vector<8x2xf32>
    %78 = tpu.matmul %76, %77, %cst_33 {dimension_numbers = #tpu.dot_dimension_numbers<[1], [1], [0], [0], [0, 0, 1, 0], [], []>} : vector<8x2xf32>, vector<2x2xf32>, vector<8x2xf32> -> vector<8x2xf32>
    %79 = arith.addf %75, %78 : vector<8x2xf32>
    %cst_34 = arith.constant 0.000000e+00 : f32
    %80 = vector.broadcast %cst_34 : f32 to vector<8x2xf32>
    %81 = arith.cmpf oge, %79, %80 : vector<8x2xf32>
    %cst_35 = arith.constant 0.00999999977 : f32
    %82 = vector.broadcast %cst_35 : f32 to vector<8x2xf32>
    %83 = arith.mulf %82, %79 : vector<8x2xf32>
    %84 = arith.select %81, %79, %83 : vector<8x2xi1>, vector<8x2xf32>
    %c0_36 = arith.constant 0 : index
    %c0_37 = arith.constant 0 : index
    %85 = vector.load %arg10[%c0_36, %c0_37] : memref<1x2xf32, #tpu.memory_space<vmem>>, vector<1x2xf32>
    %cst_38 = arith.constant dense<0xFF800000> : vector<2xf32>
    %86 = vector.multi_reduction <maximumf>, %84, %cst_38 [0] : vector<8x2xf32> to vector<2xf32>
    %87 = vector.shape_cast %86 : vector<2xf32> to vector<1x2xf32>
    %88 = arith.maximumf %85, %87 : vector<1x2xf32>
    %89 = arith.subf %85, %88 : vector<1x2xf32>
    %90 = math.exp %89 : vector<1x2xf32>
    %91 = vector.broadcast %88 : vector<1x2xf32> to vector<8x2xf32>
    %92 = arith.subf %84, %91 : vector<8x2xf32>
    %93 = math.exp %92 : vector<8x2xf32>
    %c0_39 = arith.constant 0 : index
    %c0_40 = arith.constant 0 : index
    %94 = vector.load %arg11[%c0_39, %c0_40] : memref<8x2xf32, #tpu.memory_space<vmem>>, vector<8x2xf32>
    %95 = vector.broadcast %90 : vector<1x2xf32> to vector<8x2xf32>
    %96 = arith.mulf %94, %95 : vector<8x2xf32>
    %cst_41 = arith.constant dense<0.000000e+00> : vector<8x2xf32>
    %97 = tpu.matmul %17, %93, %cst_41 {dimension_numbers = #tpu.dot_dimension_numbers<[0], [0], [1], [1], [0, 1, 1, 1], [], []>} : vector<8x8xf32>, vector<8x2xf32>, vector<8x2xf32> -> vector<8x2xf32>
    %98 = arith.addf %96, %97 : vector<8x2xf32>
    %c0_42 = arith.constant 0 : index
    %c0_43 = arith.constant 0 : index
    %99 = vector.load %arg11[%c0_42, %c0_43] : memref<8x2xf32, #tpu.memory_space<vmem>>, vector<8x2xf32>
    tpu.vector_store %arg11[%c0_42, %c0_43], %98 {strides = array<i32>} : memref<8x2xf32, #tpu.memory_space<vmem>>, vector<8x2xf32>,
    %cst_44 = arith.constant dense<0.000000e+00> : vector<8x64xf32>
    %100 = tpu.matmul %93, %1, %cst_44 {dimension_numbers = #tpu.dot_dimension_numbers<[1], [0], [0], [1], [0, 0, 1, 1], [], []>} : vector<8x2xf32>, vector<2x64xf32>, vector<8x64xf32> -> vector<8x64xf32>
    %c0_45 = arith.constant 0 : index
    %c0_46 = arith.constant 0 : index
    %101 = vector.load %arg12[%c0_45, %c0_46] : memref<8x64xf32, #tpu.memory_space<vmem>>, vector<8x64xf32>
    %cst_47 = arith.constant dense<0.000000e+00> : vector<1x64xf32>
    %102 = tpu.matmul %90, %1, %cst_47 {dimension_numbers = #tpu.dot_dimension_numbers<[1], [0], [0], [1], [0, 0, 1, 1], [], []>} : vector<1x2xf32>, vector<2x64xf32>, vector<1x64xf32> -> vector<1x64xf32>
    %103 = vector.broadcast %102 : vector<1x64xf32> to vector<8x64xf32>
    %104 = arith.mulf %101, %103 : vector<8x64xf32>
    %105 = arith.mulf %70, %100 : vector<8x64xf32>
    %cst_48 = arith.constant dense<0.000000e+00> : vector<8x64xf32>
    %106 = tpu.matmul %17, %105, %cst_48 {dimension_numbers = #tpu.dot_dimension_numbers<[0], [0], [1], [1], [0, 1, 1, 1], [], []>} : vector<8x8xf32>, vector<8x64xf32>, vector<8x64xf32> -> vector<8x64xf32>
    %107 = arith.addf %104, %106 : vector<8x64xf32>
    %c0_49 = arith.constant 0 : index
    %c0_50 = arith.constant 0 : index
    %108 = vector.load %arg12[%c0_49, %c0_50] : memref<8x64xf32, #tpu.memory_space<vmem>>, vector<8x64xf32>
    tpu.vector_store %arg12[%c0_49, %c0_50], %107 {strides = array<i32>} : memref<8x64xf32, #tpu.memory_space<vmem>>, vector<8x64xf32>,
    %c0_51 = arith.constant 0 : index
    %c0_52 = arith.constant 0 : index
    %109 = vector.load %arg10[%c0_51, %c0_52] : memref<1x2xf32, #tpu.memory_space<vmem>>, vector<1x2xf32>
    tpu.vector_store %arg10[%c0_51, %c0_52], %88 {strides = array<i32>} : memref<1x2xf32, #tpu.memory_space<vmem>>, vector<1x2xf32>,
    %c3_i32 = arith.constant 3 : i32
    %110 = arith.cmpi eq, %arg0, %c3_i32 : i32
    %111 = arith.extui %110 : i1 to i32
    %c0_i32_53 = arith.constant 0 : i32
    %112 = arith.cmpi ne, %111, %c0_i32_53 : i32
    scf.if %112 {
      %c32 = arith.constant 32 : index
      %c0_54 = arith.constant 0 : index
      %113 = vector.load %arg7[%c32, %c0_54] : memref<66x64xf32, #tpu.memory_space<vmem>>, vector<32x64xf32>
      %c0_55 = arith.constant 0 : index
      %c0_56 = arith.constant 0 : index
      %114 = vector.load %arg11[%c0_55, %c0_56] : memref<8x2xf32, #tpu.memory_space<vmem>>, vector<8x2xf32>
      %cst_57 = arith.constant dense<0.000000e+00> : vector<8x64xf32>
      %115 = tpu.matmul %114, %1, %cst_57 {dimension_numbers = #tpu.dot_dimension_numbers<[1], [0], [0], [1], [0, 0, 1, 1], [], []>} : vector<8x2xf32>, vector<2x64xf32>, vector<8x64xf32> -> vector<8x64xf32>
      %cst_58 = arith.constant 1.000000e-16 : f32
      %116 = vector.broadcast %cst_58 : f32 to vector<8x64xf32>
      %117 = arith.addf %115, %116 : vector<8x64xf32>
      %c0_59 = arith.constant 0 : index
      %c0_60 = arith.constant 0 : index
      %118 = vector.load %arg12[%c0_59, %c0_60] : memref<8x64xf32, #tpu.memory_space<vmem>>, vector<8x64xf32>
      %119 = arith.divf %118, %117 : vector<8x64xf32>
      %cst_61 = arith.constant 0.000000e+00 : f32
      %120 = vector.broadcast %cst_61 : f32 to vector<8x64xf32>
      %121 = arith.cmpf ogt, %119, %120 : vector<8x64xf32>
      %cst_62 = arith.constant 0.000000e+00 : f32
      %122 = vector.broadcast %cst_62 : f32 to vector<8x64xf32>
      %123 = arith.minimumf %119, %122 : vector<8x64xf32>
      %124 = math.exp %123 : vector<8x64xf32>
      %cst_63 = arith.constant 1.000000e+00 : f32
      %125 = vector.broadcast %cst_63 : f32 to vector<8x64xf32>
      %126 = arith.subf %124, %125 : vector<8x64xf32>
      %127 = arith.select %121, %119, %126 : vector<8x64xi1>, vector<8x64xf32>
      %cst_64 = arith.constant 0.000000e+00 : f32
      %128 = vector.broadcast %cst_64 : f32 to vector<8x64xf32>
      %129 = arith.cmpf ogt, %127, %128 : vector<8x64xf32>
      %cst_65 = arith.constant 0.000000e+00 : f32
      %130 = vector.broadcast %cst_65 : f32 to vector<8x64xf32>
      %131 = arith.minimumf %127, %130 : vector<8x64xf32>
      %132 = math.exp %131 : vector<8x64xf32>
      %cst_66 = arith.constant 1.000000e+00 : f32
      %133 = vector.broadcast %cst_66 : f32 to vector<8x64xf32>
      %134 = arith.subf %132, %133 : vector<8x64xf32>
      %135 = arith.select %129, %127, %134 : vector<8x64xi1>, vector<8x64xf32>
      %cst_67 = arith.constant dense<0.000000e+00> : vector<8x32xf32>
      %136 = tpu.matmul %135, %113, %cst_67 {dimension_numbers = #tpu.dot_dimension_numbers<[1], [1], [0], [0], [0, 0, 1, 0], [], []>} : vector<8x64xf32>, vector<32x64xf32>, vector<8x32xf32> -> vector<8x32xf32>
      %c0_68 = arith.constant 0 : index
      %c0_69 = arith.constant 0 : index
      %137 = vector.load %arg9[%c0_68, %c0_69] : memref<8x32xf32, #tpu.memory_space<vmem>>, vector<8x32xf32>
      tpu.vector_store %arg9[%c0_68, %c0_69], %136 {strides = array<i32>} : memref<8x32xf32, #tpu.memory_space<vmem>>, vector<8x32xf32>,
    } else {
    }
    return
  }
  func.func @transform_0(%arg0: i32) -> (i32, i32) {
    %c0_i32 = arith.constant 0 : i32
    %c0_i32_0 = arith.constant 0 : i32
    return %arg0, %c0_i32 : i32, i32
  }
  func.func @transform_1(%arg0: i32) -> (i32, i32) {
    %c0_i32 = arith.constant 0 : i32
    %c0_i32_0 = arith.constant 0 : i32
    return %arg0, %c0_i32 : i32, i32
  }
  func.func @transform_2(%arg0: i32) -> (i32, i32) {
    %c0_i32 = arith.constant 0 : i32
    %c0_i32_0 = arith.constant 0 : i32
    %c0_i32_1 = arith.constant 0 : i32
    return %c0_i32, %c0_i32_0 : i32, i32
  }
  func.func @transform_3(%arg0: i32) -> (i32, i32) {
    %c0_i32 = arith.constant 0 : i32
    %c0_i32_0 = arith.constant 0 : i32
    %c0_i32_1 = arith.constant 0 : i32
    return %c0_i32, %c0_i32_0 : i32, i32
  }
  func.func @transform_4(%arg0: i32) -> (i32, i32) {
    %c0_i32 = arith.constant 0 : i32
    %c0_i32_0 = arith.constant 0 : i32
    %c0_i32_1 = arith.constant 0 : i32
    return %c0_i32, %c0_i32_0 : i32, i32
  }
  func.func @transform_5(%arg0: i32) -> (i32, i32) {
    %c0_i32 = arith.constant 0 : i32
    %c0_i32_0 = arith.constant 0 : i32
    %c0_i32_1 = arith.constant 0 : i32
    return %c0_i32, %c0_i32_0 : i32, i32
  }
  func.func @transform_6(%arg0: i32) -> (i32, i32) {
    %c0_i32 = arith.constant 0 : i32
    %c0_i32_0 = arith.constant 0 : i32
    %c0_i32_1 = arith.constant 0 : i32
    return %c0_i32, %c0_i32_0 : i32, i32
  }
  func.func @transform_7(%arg0: i32) -> (i32, i32) {
    %c0_i32 = arith.constant 0 : i32
    %c0_i32_0 = arith.constant 0 : i32
    %c0_i32_1 = arith.constant 0 : i32
    return %c0_i32, %c0_i32_0 : i32, i32
  }
  func.func @transform_8(%arg0: i32) -> (i32, i32) {
    %c0_i32 = arith.constant 0 : i32
    %c0_i32_0 = arith.constant 0 : i32
    %c0_i32_1 = arith.constant 0 : i32
    return %c0_i32, %c0_i32_0 : i32, i32
  }
}

</mosaic_0001>

<llo_original>
// kernel: tpu_custom_call.1
$region0: #{tpu_custom_call.1}
  #allocation0 [shape = 'u32[]', space=smem, size = 0x4, offset = 0x4, fixed_abs, tag = 'smem constant byte address 0x4 - core index']
  #allocation1 [shape = 'u32[72,128]{1,0:T(1,128)}', space=vmem, size = 0x9000, scoped, tag = 'internal scratch']
  #allocation2 [shape = 'f32[1,2]{1,0:T(1,128)}', space=vmem, size = 0x200, scoped, tag = 'scratch operand']
  #allocation3 [shape = 'f32[8,2]{1,0:T(8,128)}', space=vmem, size = 0x1000, scoped, tag = 'scratch operand']
  #allocation4 [shape = 'f32[8,64]{1,0:T(8,128)}', space=vmem, size = 0x1000, scoped, tag = 'scratch operand']
  #allocation5 [shape = 'f32[8,2]{1,0:T(8,128)}', space=vmem, size = 0x1000, scoped, tag = 'scratch operand']
  %s0 = inlined_call_operand.vmem [shape: s32[32,2], index: 0, kind: input, shape index: {}]
  %s1 = inlined_call_operand.vmem [shape: f32[32,2], index: 1, kind: input, shape index: {}]
  %s2 = inlined_call_operand.vmem [shape: f32[16,2], index: 2, kind: input, shape index: {}]
  %s3 = inlined_call_operand.vmem [shape: f32[8,32], index: 3, kind: input, shape index: {}]
  %s4 = inlined_call_operand.vmem [shape: f32[8,4], index: 4, kind: input, shape index: {}]
  %s5 = inlined_call_operand.vmem [shape: f32[5,32], index: 5, kind: input, shape index: {}]
  %s6 = inlined_call_operand.vmem [shape: f32[66,64], index: 6, kind: input, shape index: {}]
  %s7 = inlined_call_operand.vmem [shape: f32[2,66], index: 7, kind: input, shape index: {}]
  %s8 = inlined_call_operand.hbm [shape: f32[8,32], index: 8, kind: output, shape index: {}]
  %s9 = sld [smem:[#allocation0]]
  $region73: #{tpu_custom_call.1} parent=0
    _
  %s11 = ssub.s32 1, %s9
  %s12 = scalar_select 0, %s11, %s9
  $region1: #{tpu_custom_call.1} parent=0
    #allocation6 [shape = 'u8[4096]{0}', space=vmem, size = 0x1000, scoped, tag = 'output window, operand 0, single buffered']
    #allocation7 [shape = 's32[2]{0}', space=sflag, size = 0x8, scoped, tag = 'scoped memory for tpu_custom_call.1']
    %13 = vsyncpa [#allocation7], 0
    loop: start=0, step=1, limit=6
    $region2: #{tpu_custom_call.1} parent=1 // loop_pre_header
      _
    $region3: #{tpu_custom_call.1} parent=1 // loop_header
      %s15 = sphi 0, %s19
      %p16 = scmp.ge.s32.totalorder %s15, 6
      %s25 = sphi 0, %s27
      %s28 = sphi 0, %s25
      %s29 = sphi 0, %s28
      %s45 = sphi 0, %s29
      %s51 = sphi 0, %s53
      %s54 = sphi 0, %s51
      %s55 = sphi 0, %s54
      %s71 = sphi 0, %s55
      %s75 = sphi 0, %s75
      %s77 = sphi 0, %s75
      %s78 = sphi 0, %s77
      %s92 = sphi 0, %s78
      %s96 = sphi 0, %s96
      %s98 = sphi 0, %s96
      %s99 = sphi 0, %s98
      %s113 = sphi 0, %s99
      %s117 = sphi 0, %s117
      %s119 = sphi 0, %s117
      %s120 = sphi 0, %s119
      %s134 = sphi 0, %s120
      %s138 = sphi 0, %s138
      %s140 = sphi 0, %s138
      %s141 = sphi 0, %s140
      %s155 = sphi 0, %s141
      %s159 = sphi 0, %s159
      %s161 = sphi 0, %s159
      %s162 = sphi 0, %s161
      %s176 = sphi 0, %s162
      %s180 = sphi 0, %s180
      %s182 = sphi 0, %s180
      %s183 = sphi 0, %s182
      %s197 = sphi 0, %s183
      %s201 = sphi 0, %s201
      %s203 = sphi 0, %s201
      %s204 = sphi 0, %s203
      %s218 = sphi 0, %s204
    $region4: #{tpu_custom_call.1} parent=1 // loop_header_branch
      %18 = sbr.rel (%p16) target = $region8
    $region5: #{tpu_custom_call.1} parent=1 // loop_body
      %s20 = ssub.s32 %s15, 1
      %s21 = ssub.s32 %s15, 2
      %s22 = sadd.s32 %s15, 1
      %s23 = ssub.s32 %s15, %s22
      %p24 = scmp.eq.s32.totalorder %s23, 0
      %s26 = sadd.s32 %s25, 1
      %s27 = scalar_select %p24, %s25, %s26
      %p30 = pneg %p24
      %p31 = scmp.eq.s32.totalorder %s15, 3
      %p32 = por %p30, %p31
      %p33 = scmp.ne.s32.totalorder %s25, %s28
      %p34 = scmp.eq.s32.totalorder %s15, 0
      %p35 = por %p33, %p34
      %p36 = scmp.ne.s32.totalorder %s25, %s28
      %p37 = scmp.eq.s32.totalorder %s20, 3
      %p38 = por %p36, %p37
      %p39 = scmp.ne.s32.totalorder %s28, %s29
      %p40 = scmp.eq.s32.totalorder %s20, 0
      %p41 = por %p39, %p40
      %p42 = scmp.ne.s32.totalorder %s28, %s29
      %p43 = scmp.eq.s32.totalorder %s21, 3
      %p44 = por %p42, %p43
      %p46 = scmp.ne.s32.totalorder %s29, %s45
      %p47 = scmp.eq.s32.totalorder %s21, 0
      %p48 = por %p46, %p47
      %s49 = ssub.s32 %s15, %s22
      %p50 = scmp.eq.s32.totalorder %s49, 0
      %s52 = sadd.s32 %s51, 1
      %s53 = scalar_select %p50, %s51, %s52
      %p56 = pneg %p50
      %p57 = scmp.eq.s32.totalorder %s15, 3
      %p58 = por %p56, %p57
      %p59 = scmp.ne.s32.totalorder %s51, %s54
      %p60 = scmp.eq.s32.totalorder %s15, 0
      %p61 = por %p59, %p60
      %p62 = scmp.ne.s32.totalorder %s51, %s54
      %p63 = scmp.eq.s32.totalorder %s20, 3
      %p64 = por %p62, %p63
      %p65 = scmp.ne.s32.totalorder %s54, %s55
      %p66 = scmp.eq.s32.totalorder %s20, 0
      %p67 = por %p65, %p66
      %p68 = scmp.ne.s32.totalorder %s54, %s55
      %p69 = scmp.eq.s32.totalorder %s21, 3
      %p70 = por %p68, %p69
      %p72 = scmp.ne.s32.totalorder %s55, %s71
      %p73 = scmp.eq.s32.totalorder %s21, 0
      %p74 = por %p72, %p73
      %s76 = sadd.s32 %s75, 1
      %p79 = scmp.eq.s32.totalorder %s15, 3
      %p80 = scmp.ne.s32.totalorder %s75, %s77
      %p81 = scmp.eq.s32.totalorder %s15, 0
      %p82 = por %p80, %p81
      %p83 = scmp.ne.s32.totalorder %s75, %s77
      %p84 = scmp.eq.s32.totalorder %s20, 3
      %p85 = por %p83, %p84
      %p86 = scmp.ne.s32.totalorder %s77, %s78
      %p87 = scmp.eq.s32.totalorder %s20, 0
      %p88 = por %p86, %p87
      %p89 = scmp.ne.s32.totalorder %s77, %s78
      %p90 = scmp.eq.s32.totalorder %s21, 3
      %p91 = por %p89, %p90
      %p93 = scmp.ne.s32.totalorder %s78, %s92
      %p94 = scmp.eq.s32.totalorder %s21, 0
      %p95 = por %p93, %p94
      %s97 = sadd.s32 %s96, 1
      %p100 = scmp.eq.s32.totalorder %s15, 3
      %p101 = scmp.ne.s32.totalorder %s96, %s98
      %p102 = scmp.eq.s32.totalorder %s15, 0
      %p103 = por %p101, %p102
      %p104 = scmp.ne.s32.totalorder %s96, %s98
      %p105 = scmp.eq.s32.totalorder %s20, 3
      %p106 = por %p104, %p105
      %p107 = scmp.ne.s32.totalorder %s98, %s99
      %p108 = scmp.eq.s32.totalorder %s20, 0
      %p109 = por %p107, %p108
      %p110 = scmp.ne.s32.totalorder %s98, %s99
      %p111 = scmp.eq.s32.totalorder %s21, 3
      %p112 = por %p110, %p111
      %p114 = scmp.ne.s32.totalorder %s99, %s113
      %p115 = scmp.eq.s32.totalorder %s21, 0
      %p116 = por %p114, %p115
      %s118 = sadd.s32 %s117, 1
      %p121 = scmp.eq.s32.totalorder %s15, 3
      %p122 = scmp.ne.s32.totalorder %s117, %s119
      %p123 = scmp.eq.s32.totalorder %s15, 0
      %p124 = por %p122, %p123
      %p125 = scmp.ne.s32.totalorder %s117, %s119
      %p126 = scmp.eq.s32.totalorder %s20, 3
      %p127 = por %p125, %p126
      %p128 = scmp.ne.s32.totalorder %s119, %s120
      %p129 = scmp.eq.s32.totalorder %s20, 0
      %p130 = por %p128, %p129
      %p131 = scmp.ne.s32.totalorder %s119, %s120
      %p132 = scmp.eq.s32.totalorder %s21, 3
      %p133 = por %p131, %p132
      %p135 = scmp.ne.s32.totalorder %s120, %s134
      %p136 = scmp.eq.s32.totalorder %s21, 0
      %p137 = por %p135, %p136
      %s139 = sadd.s32 %s138, 1
      %p142 = scmp.eq.s32.totalorder %s15, 3
      %p143 = scmp.ne.s32.totalorder %s138, %s140
      %p144 = scmp.eq.s32.totalorder %s15, 0
      %p145 = por %p143, %p144
      %p146 = scmp.ne.s32.totalorder %s138, %s140
      %p147 = scmp.eq.s32.totalorder %s20, 3
      %p148 = por %p146, %p147
      %p149 = scmp.ne.s32.totalorder %s140, %s141
      %p150 = scmp.eq.s32.totalorder %s20, 0
      %p151 = por %p149, %p150
      %p152 = scmp.ne.s32.totalorder %s140, %s141
      %p153 = scmp.eq.s32.totalorder %s21, 3
      %p154 = por %p152, %p153
      %p156 = scmp.ne.s32.totalorder %s141, %s155
      %p157 = scmp.eq.s32.totalorder %s21, 0
      %p158 = por %p156, %p157
      %s160 = sadd.s32 %s159, 1
      %p163 = scmp.eq.s32.totalorder %s15, 3
      %p164 = scmp.ne.s32.totalorder %s159, %s161
      %p165 = scmp.eq.s32.totalorder %s15, 0
      %p166 = por %p164, %p165
      %p167 = scmp.ne.s32.totalorder %s159, %s161
      %p168 = scmp.eq.s32.totalorder %s20, 3
      %p169 = por %p167, %p168
      %p170 = scmp.ne.s32.totalorder %s161, %s162
      %p171 = scmp.eq.s32.totalorder %s20, 0
      %p172 = por %p170, %p171
      %p173 = scmp.ne.s32.totalorder %s161, %s162
      %p174 = scmp.eq.s32.totalorder %s21, 3
      %p175 = por %p173, %p174
      %p177 = scmp.ne.s32.totalorder %s162, %s176
      %p178 = scmp.eq.s32.totalorder %s21, 0
      %p179 = por %p177, %p178
      %s181 = sadd.s32 %s180, 1
      %p184 = scmp.eq.s32.totalorder %s15, 3
      %p185 = scmp.ne.s32.totalorder %s180, %s182
      %p186 = scmp.eq.s32.totalorder %s15, 0
      %p187 = por %p185, %p186
      %p188 = scmp.ne.s32.totalorder %s180, %s182
      %p189 = scmp.eq.s32.totalorder %s20, 3
      %p190 = por %p188, %p189
      %p191 = scmp.ne.s32.totalorder %s182, %s183
      %p192 = scmp.eq.s32.totalorder %s20, 0
      %p193 = por %p191, %p192
      %p194 = scmp.ne.s32.totalorder %s182, %s183
      %p195 = scmp.eq.s32.totalorder %s21, 3
      %p196 = por %p194, %p195
      %p198 = scmp.ne.s32.totalorder %s183, %s197
      %p199 = scmp.eq.s32.totalorder %s21, 0
      %p200 = por %p198, %p199
      %s202 = sadd.s32 %s201, 1
      %p205 = scmp.eq.s32.totalorder %s15, 3
      %p206 = scmp.ne.s32.totalorder %s201, %s203
      %p207 = scmp.eq.s32.totalorder %s15, 0
      %p208 = por %p206, %p207
      %p209 = scmp.ne.s32.totalorder %s201, %s203
      %p210 = scmp.eq.s32.totalorder %s20, 3
      %p211 = por %p209, %p210
      %p212 = scmp.ne.s32.totalorder %s203, %s204
      %p213 = scmp.eq.s32.totalorder %s20, 0
      %p214 = por %p212, %p213
      %p215 = scmp.ne.s32.totalorder %s203, %s204
      %p216 = scmp.eq.s32.totalorder %s21, 3
      %p217 = por %p215, %p216
      %p219 = scmp.ne.s32.totalorder %s204, %s218
      %p220 = scmp.eq.s32.totalorder %s21, 0
      %p221 = por %p219, %p220
      %p222 = scmp.le.s32.totalorder 1, %s15
      %p223 = scmp.lt.s32.totalorder %s15, 5
      %p224 = pnand %p222, %p223
      %p225 = pneg %p224
      // Predicated region
      $region9: #{tpu_custom_call.1} parent=5 // pred_check
        _
      $region10: #{tpu_custom_call.1} parent=5 // pred_check_branch
        %227 = sbr.rel (%p224) target = $region12
      $region11: #{tpu_custom_call.1} parent=5 // pred_region
        %s228 = ssub.s32 %s15, 1
        // Predicated region
        $region13: #{tpu_custom_call.1} parent=11 // pred_check
          %p229 = pneg %p88
        $region14: #{tpu_custom_call.1} parent=11 // pred_check_branch
          %231 = sbr.rel (%p229) target = $region16
        $region15: #{tpu_custom_call.1} parent=11 // pred_region
          _
        $region16: #{tpu_custom_call.1} parent=11 // pred_fallthru
          _
        // Predicated region
        $region17: #{tpu_custom_call.1} parent=11 // pred_check
          %p232 = pneg %p109
        $region18: #{tpu_custom_call.1} parent=11 // pred_check_branch
          %234 = sbr.rel (%p232) target = $region20
        $region19: #{tpu_custom_call.1} parent=11 // pred_region
          _
        $region20: #{tpu_custom_call.1} parent=11 // pred_fallthru
          _
        // Predicated region
        $region21: #{tpu_custom_call.1} parent=11 // pred_check
          %p235 = pneg %p130
        $region22: #{tpu_custom_call.1} parent=11 // pred_check_branch
          %237 = sbr.rel (%p235) target = $region24
        $region23: #{tpu_custom_call.1} parent=11 // pred_region
          _
        $region24: #{tpu_custom_call.1} parent=11 // pred_fallthru
          _
        // Predicated region
        $region25: #{tpu_custom_call.1} parent=11 // pred_check
          %p238 = pneg %p151
        $region26: #{tpu_custom_call.1} parent=11 // pred_check_branch
          %240 = sbr.rel (%p238) target = $region28
        $region27: #{tpu_custom_call.1} parent=11 // pred_region
          _
        $region28: #{tpu_custom_call.1} parent=11 // pred_fallthru
          _
        // Predicated region
        $region29: #{tpu_custom_call.1} parent=11 // pred_check
          %p241 = pneg %p172
        $region30: #{tpu_custom_call.1} parent=11 // pred_check_branch
          %243 = sbr.rel (%p241) target = $region32
        $region31: #{tpu_custom_call.1} parent=11 // pred_region
          _
        $region32: #{tpu_custom_call.1} parent=11 // pred_fallthru
          _
        // Predicated region
        $region33: #{tpu_custom_call.1} parent=11 // pred_check
          %p244 = pneg %p193
        $region34: #{tpu_custom_call.1} parent=11 // pred_check_branch
          %246 = sbr.rel (%p244) target = $region36
        $region35: #{tpu_custom_call.1} parent=11 // pred_region
          _
        $region36: #{tpu_custom_call.1} parent=11 // pred_fallthru
          _
      $region12: #{tpu_custom_call.1} parent=5 // pred_fallthru
        _
      %p247 = scmp.lt.s32.totalorder %s15, 4
      // Predicated region
      $region37: #{tpu_custom_call.1} parent=5 // pred_check
        %p248 = pneg %p247
      $region38: #{tpu_custom_call.1} parent=5 // pred_check_branch
        %250 = sbr.rel (%p248) target = $region40
      $region39: #{tpu_custom_call.1} parent=5 // pred_region
        // Predicated region
        $region41: #{tpu_custom_call.1} parent=39 // pred_check
          %p251 = pneg %p35
        $region42: #{tpu_custom_call.1} parent=39 // pred_check_branch
          %253 = sbr.rel (%p251) target = $region44
        $region43: #{tpu_custom_call.1} parent=39 // pred_region
          %p254 = scmp.lt.s32.totalorder %s15, 3
          %s255 = scalar_select %p254, %s15, 3
          %s256 = smul.addr %s255, 8
          %s257 = scalar_lea.vmem %s0, %s256
        $region44: #{tpu_custom_call.1} parent=39 // pred_fallthru
          _
        // Predicated region
        $region45: #{tpu_custom_call.1} parent=39 // pred_check
          %p258 = pneg %p61
        $region46: #{tpu_custom_call.1} parent=39 // pred_check_branch
          %260 = sbr.rel (%p258) target = $region48
        $region47: #{tpu_custom_call.1} parent=39 // pred_region
          %p261 = scmp.lt.s32.totalorder %s15, 3
          %s262 = scalar_select %p261, %s15, 3
          %s263 = smul.addr %s262, 8
          %s264 = scalar_lea.vmem %s1, %s263
        $region48: #{tpu_custom_call.1} parent=39 // pred_fallthru
          _
      $region40: #{tpu_custom_call.1} parent=5 // pred_fallthru
        _
      %p265 = scmp.le.s32.totalorder 1, %s15
      %p266 = scmp.lt.s32.totalorder %s15, 5
      %p267 = pnand %p265, %p266
      %p268 = pneg %p267
      // Predicated region
      $region49: #{tpu_custom_call.1} parent=5 // pred_check
        _
      $region50: #{tpu_custom_call.1} parent=5 // pred_check_branch
        %270 = sbr.rel (%p267) target = $region52
      $region51: #{tpu_custom_call.1} parent=5 // pred_region
        %s271 = ssub.s32 %s15, 1
        %p272 = scmp.lt.s32.totalorder %s20, 3
        %s273 = scalar_select %p272, %s20, 3
        %s274 = smul.addr %s273, 8
        %s275 = scalar_lea.vmem %s0, %s274
        %p276 = pneg %p41
        %p277 = pneg %p38
        %p278 = scmp.lt.s32.totalorder %s20, 3
        %s279 = scalar_select %p278, %s20, 3
        %s280 = smul.addr %s279, 8
        %s281 = scalar_lea.vmem %s1, %s280
        %p282 = pneg %p67
        %p283 = pneg %p64
        %p284 = pneg %p88
        %p285 = pneg %p85
        %p286 = pneg %p109
        %p287 = pneg %p106
        %p288 = pneg %p130
        %p289 = pneg %p127
        %p290 = pneg %p151
        %p291 = pneg %p148
        %p292 = pneg %p172
        %p293 = pneg %p169
        %p294 = pneg %p193
        %p295 = pneg %p190
        %p296 = pneg %p214
        %p297 = pneg %p211
        %p298 = scmp.lt.s32.totalorder %s20, 3
        %s299 = scalar_select %p298, %s20, 3
        %s300 = smul.addr %s299, 8
        %s301 = scalar_lea.vmem %s0, %s300
        %p302 = scmp.lt.s32.totalorder %s20, 3
        %s303 = scalar_select %p302, %s20, 3
        %s304 = smul.addr %s303, 8
        %s305 = scalar_lea.vmem %s1, %s304
        %v306 = vld [vmem:[%s6] sm:$0xff]
        %v307 = vld [vmem:[%s6 + $0x8] sm:$0xff]
        %v308 = vld [vmem:[%s6 + $0x10] sm:$0xff]
        %v309 = vld [vmem:[%s6 + $0x18] sm:$0xff]
        %v310 = vld [vmem:[%s6 + $0x40] sm:$0x3]
        %p311 = scmp.eq.s32.totalorder %s20, 0
        // Predicated region
        $region53: #{tpu_custom_call.1} parent=51 // pred_check
          %p312 = pneg %p311
        $region54: #{tpu_custom_call.1} parent=51 // pred_check_branch
          %314 = sbr.rel (%p312) target = $region56
        $region55: #{tpu_custom_call.1} parent=51 // pred_region
          %vm315 = vcmask 8192
          %316 = vst.msk [vmem:[#allocation2] sm:$0x1] %vm315, -inf
          %vm317 = vcmask 15360
          %318 = vst.msk [vmem:[#allocation3] sm:$0xff] %vm317, 0.0
          %vm319 = vcmask 523264
          %320 = vst.msk [vmem:[#allocation4] sm:$0xff] %vm319, 0.0
          %v321 = vld [vmem:[%s3] sm:$0xff]
          %v322 = vld [vmem:[%s7] sm:$0x3]
          %324 = vrot.lane.b32.xlu0 %v322, 96
          %v325 = vpop.permute.xlu0 %324
          %vm326 = vcmask 261120
          %v328 = vsel %vm326, %v321, 0
          %v330 = vsel %vm326, %v325, 0
          %332 = vmatpush.xpose.msra.mxu0 0.0
          %333 = vmatpush.xpose.msra.mxu0 0.0
          %334 = vmatpush.xpose.msra.mxu0 0.0
          %335 = vmatpush.xpose.msra.mxu0 0.0
          %336 = vmatpush.xpose.msra.mxu0 0.0
          %337 = vmatpush.xpose.msra.mxu0 0.0
          %338 = vmatpush.xpose.msra.mxu0 0.0
          %339 = vmatpush.xpose.msra.mxu0 0.0
          %340 = vmatpush.xpose.msra.mxu0 0.0
          %341 = vmatpush.xpose.msra.mxu0 0.0
          %342 = vmatpush.xpose.msra.mxu0 0.0
          %343 = vmatpush.xpose.msra.mxu0 0.0
          %344 = vmatpush.xpose.msra.mxu0 0.0
          %345 = vmatpush.xpose.msra.mxu0 0.0
          %346 = vmatpush.xpose.msra.mxu0 0.0
          %347 = vmatpush.xpose.msra.mxu0 %v330
          %348 = vmatmul.f32.gmra.mxu0 %v328
          %v349 = vpop.f32.mrf.mxu0
          %v350 = vadd.f32 0.0, %v349
          %351 = vdwg.mxu0
          %352 = vst.msk [vmem:[#allocation5] sm:$0xff] %vm317, %v350
        $region56: #{tpu_custom_call.1} parent=51 // pred_fallthru
          _
        %v353 = vld [vmem:[%s301] sm:$0xff]
        %v354 = vlaneseq
        %v355 = vand.u32 %v354, 127
        %356 = vset.pattern.permute.xlu0 0
        %357 = vperm.xlu0 %356, %v353
        %v358 = vpop.permute.xlu0 %357
        %vm359 = vcmp.eq.s32.totalorder %v355, %v358
        %v360 = vsel %vm359, 1, 0
        %v361 = vcvt.s32.f32 %v360
        %362 = vset.pattern.permute.xlu0 1
        %363 = vperm.xlu0 %362, %v353
        %v364 = vpop.permute.xlu0 %363
        %vm365 = vcmp.eq.s32.totalorder %v355, %v364
        %v366 = vsel %vm365, 1, 0
        %v367 = vcvt.s32.f32 %v366
        %v368 = vld [vmem:[%s2] sm:$0xff]
        %v369 = vld [vmem:[%s2 + $0x8] sm:$0xff]
        %vm370 = vcmask 130048
        %v372 = vsel %vm370, %v361, 0
        %374 = vmatpush.msra.mxu0 0.0
        %375 = vmatpush.msra.mxu0 0.0
        %376 = vmatpush.msra.mxu0 0.0
        %377 = vmatpush.msra.mxu0 0.0
        %378 = vmatpush.msra.mxu0 0.0
        %379 = vmatpush.msra.mxu0 0.0
        %380 = vmatpush.msra.mxu0 0.0
        %381 = vmatpush.msra.mxu0 0.0
        %382 = vmatpush.msra.mxu0 0.0
        %383 = vmatpush.msra.mxu0 0.0
        %384 = vmatpush.msra.mxu0 0.0
        %385 = vmatpush.msra.mxu0 0.0
        %386 = vmatpush.msra.mxu0 0.0
        %387 = vmatpush.msra.mxu0 0.0
        %388 = vmatpush.msra.mxu0 %v369
        %389 = vmatpush.msra.mxu0 %v368
        %390 = vmatmul.f32.gmra.mxu0 %v372
        %v391 = vpop.f32.mrf.mxu0
        %v392 = vadd.f32 0.0, %v391
        %393 = vdwg.mxu0
        %v394 = vld [vmem:[%s4] sm:$0xff]
        %vm395 = vcmask 64512
        %v397 = vsel %vm395, %v367, 0
        %399 = vmatpush.msra.mxu0 0.0
        %400 = vmatpush.msra.mxu0 0.0
        %401 = vmatpush.msra.mxu0 0.0
        %402 = vmatpush.msra.mxu0 0.0
        %403 = vmatpush.msra.mxu0 0.0
        %404 = vmatpush.msra.mxu0 0.0
        %405 = vmatpush.msra.mxu0 0.0
        %406 = vmatpush.msra.mxu0 0.0
        %407 = vmatpush.msra.mxu0 0.0
        %408 = vmatpush.msra.mxu0 0.0
        %409 = vmatpush.msra.mxu0 0.0
        %410 = vmatpush.msra.mxu0 0.0
        %411 = vmatpush.msra.mxu0 0.0
        %412 = vmatpush.msra.mxu0 0.0
        %413 = vmatpush.msra.mxu0 0.0
        %414 = vmatpush.msra.mxu0 %v394
        %415 = vmatmul.f32.gmra.mxu0 %v397
        %v416 = vpop.f32.mrf.mxu0
        %v417 = vadd.f32 0.0, %v416
        %418 = vdwg.mxu0
        %v419 = vmul.f32 %v392, %v417
        %421 = vrot.lane.b32.xlu0 %v417, 127
        %v422 = vpop.permute.xlu0 %421
        %v424 = vmul.f32 %v392, %v422
        %426 = vrot.lane.b32.xlu0 %v424, 127
        %v427 = vpop.permute.xlu0 %426
        %v429 = vadd.f32 %v419, %v427
        %430 = vrot.lane.b32.xlu0 %v417, 126
        %v431 = vpop.permute.xlu0 %430
        %v433 = vmul.f32 %v392, %v431
        %435 = vrot.lane.b32.xlu0 %v433, 127
        %v436 = vpop.permute.xlu0 %435
        %v438 = vadd.f32 %v424, %v436
        %v439 = vld [vmem:[%s5] sm:$0x1]
        %441 = vset.pattern.permute.xlu0 0
        %442 = vperm.xlu0 %441, %v429
        %v443 = vpop.permute.xlu0 %442
        %v445 = vperm.slane %v439, 0
        %v446 = vmul.f32 %v443, %v445
        %v447 = vld [vmem:[%s5 + $0x1] sm:$0x1]
        %449 = vset.pattern.permute.xlu0 0
        %450 = vperm.xlu0 %449, %v438
        %v451 = vpop.permute.xlu0 %450
        %v453 = vperm.slane %v447, 0
        %v454 = vmul.f32 %v451, %v453
        %v455 = vadd.f32 %v446, %v454
        %v456 = vld [vmem:[%s5 + $0x2] sm:$0x1]
        %v457 = vperm.slane %v456, 0
        %v458 = vadd.f32 %v455, %v457
        %vm459 = vcmask 261120
        %v460 = vsel %vm459, %v458, 0.0
        %461 = vadd.xlane.f32.xlu0 %v460
        %v462 = vpop.xlane.xlu0 %461
        %v463 = vrcp.pop 32.0
        %v464 = vmul.f32 32.0, %v463
        %v465 = vsub.f32 1.0, %v464
        %v466 = vmul.f32 %v463, %v465
        %v467 = vadd.f32 %v463, %v466
        %vm468 = vweird.f32 %v463
        %v469 = vsel %vm468, %v463, %v467
        %v470 = vmul.f32 %v462, %v469
        %v471 = vsub.f32 %v458, %v470
        %v472 = vmul.f32 %v471, %v471
        %v473 = vsel %vm459, %v472, 0.0
        %474 = vadd.xlane.f32.xlu0 %v473
        %v475 = vpop.xlane.xlu0 %474
        %v476 = vmul.f32 %v475, %v469
        %v477 = vadd.f32 %v476, 1e-05
        %v478 = vrsqrt.pop %v477
        %v479 = vmul.f32 %v478, %v477
        %v480 = vmul.f32 %v479, %v478
        %v481 = vmul.f32 0.5, %v480
        %v482 = vsub.f32 1.5, %v481
        %v483 = vmul.f32 %v478, %v482
        %vm484 = vweird.f32 %v477
        %vm485 = vweird.f32 %v478
        %vm486 = vmor %vm484, %vm485
        %v487 = vsel %vm486, %v478, %v483
        %v488 = vmul.f32 %v471, %v487
        %v489 = vld [vmem:[%s5 + $0x3] sm:$0x1]
        %v490 = vperm.slane %v489, 0
        %v491 = vmul.f32 %v488, %v490
        %v492 = vld [vmem:[%s5 + $0x4] sm:$0x1]
        %v493 = vperm.slane %v492, 0
        %v494 = vadd.f32 %v491, %v493
        %v495 = vmax.f32 %v494, 0.0
        %v497 = vsel %vm459, %v495, 0
        %499 = vmatpush.msra.mxu0 0.0
        %500 = vmatpush.msra.mxu0 0.0
        %501 = vmatpush.msra.mxu0 0.0
        %502 = vmatpush.msra.mxu0 0.0
        %503 = vmatpush.msra.mxu0 0.0
        %504 = vmatpush.msra.mxu0 0.0
        %505 = vmatpush.msra.mxu0 0.0
        %506 = vmatpush.msra.mxu0 0.0
        %507 = vmatpush.msra.mxu0 0.0
        %508 = vmatpush.msra.mxu0 0.0
        %509 = vmatpush.msra.mxu0 0.0
        %510 = vmatpush.msra.mxu0 0.0
        %511 = vmatpush.msra.mxu0 %v309
        %512 = vmatpush.msra.mxu0 %v308
        %513 = vmatpush.msra.mxu0 %v307
        %514 = vmatpush.msra.mxu0 %v306
        %515 = vmatmul.f32.gmra.mxu0 %v497
        %v516 = vpop.f32.mrf.mxu0
        %v517 = vadd.f32 0.0, %v516
        %518 = vdwg.mxu0
        %v519 = vld [vmem:[%s7] sm:$0x3]
        %v520 = vld [vmem:[#allocation5] sm:$0xff]
        %521 = vmatpush.msra.mxu0 0.0
        %522 = vmatpush.msra.mxu0 0.0
        %523 = vmatpush.msra.mxu0 0.0
        %524 = vmatpush.msra.mxu0 0.0
        %525 = vmatpush.msra.mxu0 0.0
        %526 = vmatpush.msra.mxu0 0.0
        %527 = vmatpush.msra.mxu0 0.0
        %528 = vmatpush.msra.mxu0 0.0
        %529 = vmatpush.msra.mxu0 0.0
        %530 = vmatpush.msra.mxu0 0.0
        %531 = vmatpush.msra.mxu0 0.0
        %532 = vmatpush.msra.mxu0 0.0
        %533 = vmatpush.msra.mxu0 0.0
        %534 = vmatpush.msra.mxu0 0.0
        %535 = vmatpush.msra.mxu0 0.0
        %536 = vmatpush.msra.mxu0 %v520
        %537 = vmatmul.f32.gmra.mxu0 %v397
        %v538 = vpop.f32.mrf.mxu0
        %v539 = vadd.f32 0.0, %v538
        %540 = vdwg.mxu0
        %v542 = vsel %vm459, %v519, 0
        %544 = vmatpush.xpose.msra.mxu0 0.0
        %545 = vmatpush.xpose.msra.mxu0 0.0
        %546 = vmatpush.xpose.msra.mxu0 0.0
        %547 = vmatpush.xpose.msra.mxu0 0.0
        %548 = vmatpush.xpose.msra.mxu0 0.0
        %549 = vmatpush.xpose.msra.mxu0 0.0
        %550 = vmatpush.xpose.msra.mxu0 0.0
        %551 = vmatpush.xpose.msra.mxu0 0.0
        %552 = vmatpush.xpose.msra.mxu0 0.0
        %553 = vmatpush.xpose.msra.mxu0 0.0
        %554 = vmatpush.xpose.msra.mxu0 0.0
        %555 = vmatpush.xpose.msra.mxu0 0.0
        %556 = vmatpush.xpose.msra.mxu0 0.0
        %557 = vmatpush.xpose.msra.mxu0 0.0
        %558 = vmatpush.xpose.msra.mxu0 0.0
        %559 = vmatpush.xpose.msra.mxu0 %v542
        %560 = vmatmul.f32.gmra.mxu0 %v497
        %v561 = vpop.f32.mrf.mxu0
        %v562 = vadd.f32 %v539, %v561
        %563 = vdwg.mxu0
        %v564 = vld [vmem:[%s305] sm:$0xff]
        %565 = vrot.lane.b32.xlu0 %v519, 64
        %v566 = vpop.permute.xlu0 %565
        %vm567 = vcmask 15360
        %v569 = vsel %vm567, %v564, 0
        %v571 = vsel %vm567, %v566, 0
        %573 = vmatpush.xpose.msra.mxu0 0.0
        %574 = vmatpush.xpose.msra.mxu0 0.0
        %575 = vmatpush.xpose.msra.mxu0 0.0
        %576 = vmatpush.xpose.msra.mxu0 0.0
        %577 = vmatpush.xpose.msra.mxu0 0.0
        %578 = vmatpush.xpose.msra.mxu0 0.0
        %579 = vmatpush.xpose.msra.mxu0 0.0
        %580 = vmatpush.xpose.msra.mxu0 0.0
        %581 = vmatpush.xpose.msra.mxu0 0.0
        %582 = vmatpush.xpose.msra.mxu0 0.0
        %583 = vmatpush.xpose.msra.mxu0 0.0
        %584 = vmatpush.xpose.msra.mxu0 0.0
        %585 = vmatpush.xpose.msra.mxu0 0.0
        %586 = vmatpush.xpose.msra.mxu0 0.0
        %587 = vmatpush.xpose.msra.mxu0 0.0
        %588 = vmatpush.xpose.msra.mxu0 %v571
        %589 = vmatmul.f32.gmra.mxu0 %v569
        %v590 = vpop.f32.mrf.mxu0
        %v591 = vadd.f32 0.0, %v590
        %592 = vdwg.mxu0
        %v593 = vadd.f32 %v562, %v591
        %vm594 = vcmp.ge.f32.partialorder %v593, 0.0
        %v595 = vmul.f32 %v593, 0.01
        %v596 = vsel %vm594, %v593, %v595
        %v597 = vld [vmem:[#allocation2] sm:$0x1]
        %v598 = vsel %vm567, %v596, -inf
        %v599 = vrot.slane %v598, 4
        %v600 = vmax.f32 %v598, %v599
        %v601 = vrot.slane %v600, 2
        %v602 = vmax.f32 %v600, %v601
        %v603 = vrot.slane %v602, 1
        %v604 = vmax.f32 %v602, %v603
        %v605 = vmax.f32 %v597, %v604
        %v606 = vsub.f32 %v597, %v605
        %v607 = vmul.f32 %v606, 1.442695
        %v608 = vpow.pop %v607
        %v610 = vperm.slane %v605, 0
        %v612 = vsub.f32 %v596, %v610
        %v613 = vmul.f32 %v612, 1.442695
        %v614 = vpow.pop %v613
        %v615 = vld [vmem:[#allocation3] sm:$0xff]
        %v617 = vperm.slane %v608, 0
        %v619 = vmul.f32 %v615, %v617
        %620 = vxpose.xlu0.b32.start [1/16] %v367, 128
        %621 = vxpose.xlu0.b32.cont [2/16] 0.0, 128
        %622 = vxpose.xlu0.b32.cont [3/16] 0.0, 128
        %623 = vxpose.xlu0.b32.cont [4/16] 0.0, 128
        %624 = vxpose.xlu0.b32.cont [5/16] 0.0, 128
        %625 = vxpose.xlu0.b32.cont [6/16] 0.0, 128
        %626 = vxpose.xlu0.b32.cont [7/16] 0.0, 128
        %627 = vxpose.xlu0.b32.cont [8/16] 0.0, 128
        %628 = vxpose.xlu0.b32.cont [9/16] 0.0, 128
        %629 = vxpose.xlu0.b32.cont [10/16] 0.0, 128
        %630 = vxpose.xlu0.b32.cont [11/16] 0.0, 128
        %631 = vxpose.xlu0.b32.cont [12/16] 0.0, 128
        %632 = vxpose.xlu0.b32.cont [13/16] 0.0, 128
        %633 = vxpose.xlu0.b32.cont [14/16] 0.0, 128
        %634 = vxpose.xlu0.b32.cont [15/16] 0.0, 128
        %635 = vxpose.xlu0.b32.end [16/16] 0.0, 128
        %v636 = vpop.trf.xlu0
        %v637 = vpop.trf.xlu0
        %v638 = vpop.trf.xlu0
        %v639 = vpop.trf.xlu0
        %v640 = vpop.trf.xlu0
        %v641 = vpop.trf.xlu0
        %v642 = vpop.trf.xlu0
        %v643 = vpop.trf.xlu0
        %v644 = vpop.trf.xlu0
        %v645 = vpop.trf.xlu0
        %v646 = vpop.trf.xlu0
        %v647 = vpop.trf.xlu0
        %v648 = vpop.trf.xlu0
        %v649 = vpop.trf.xlu0
        %v650 = vpop.trf.xlu0
        %v651 = vpop.trf.xlu0
        %v653 = vsel %vm395, %v636, 0
        %655 = vmatpush.msra.mxu0 0.0
        %656 = vmatpush.msra.mxu0 0.0
        %657 = vmatpush.msra.mxu0 0.0
        %658 = vmatpush.msra.mxu0 0.0
        %659 = vmatpush.msra.mxu0 0.0
        %660 = vmatpush.msra.mxu0 0.0
        %661 = vmatpush.msra.mxu0 0.0
        %662 = vmatpush.msra.mxu0 0.0
        %663 = vmatpush.msra.mxu0 0.0
        %664 = vmatpush.msra.mxu0 0.0
        %665 = vmatpush.msra.mxu0 0.0
        %666 = vmatpush.msra.mxu0 0.0
        %667 = vmatpush.msra.mxu0 0.0
        %668 = vmatpush.msra.mxu0 0.0
        %669 = vmatpush.msra.mxu0 0.0
        %670 = vmatpush.msra.mxu0 %v614
        %671 = vmatmul.f32.gmra.mxu0 %v653
        %v672 = vpop.f32.mrf.mxu0
        %v673 = vadd.f32 0.0, %v672
        %674 = vdwg.mxu0
        %v675 = vadd.f32 %v619, %v673
        %676 = vst.msk [vmem:[#allocation3] sm:$0xff] %vm567, %v675
        %v678 = vsel %vm567, %v614, 0
        %vm680 = vcmask 1041408
        %v682 = vsel %vm680, %v310, 0
        %684 = vmatpush.msra.mxu0 0.0
        %685 = vmatpush.msra.mxu0 0.0
        %686 = vmatpush.msra.mxu0 0.0
        %687 = vmatpush.msra.mxu0 0.0
        %688 = vmatpush.msra.mxu0 0.0
        %689 = vmatpush.msra.mxu0 0.0
        %690 = vmatpush.msra.mxu0 0.0
        %691 = vmatpush.msra.mxu0 0.0
        %692 = vmatpush.msra.mxu0 0.0
        %693 = vmatpush.msra.mxu0 0.0
        %694 = vmatpush.msra.mxu0 0.0
        %695 = vmatpush.msra.mxu0 0.0
        %696 = vmatpush.msra.mxu0 0.0
        %697 = vmatpush.msra.mxu0 0.0
        %698 = vmatpush.msra.mxu0 0.0
        %699 = vmatpush.msra.mxu0 %v682
        %700 = vmatmul.f32.gmra.mxu0 %v678
        %v701 = vpop.f32.mrf.mxu0
        %v702 = vadd.f32 0.0, %v701
        %703 = vdwg.mxu0
        %v704 = vld [vmem:[#allocation4] sm:$0xff]
        %v705 = vsel %vm567, %v608, 0
        %707 = vmatpush.msra.mxu0 0.0
        %708 = vmatpush.msra.mxu0 0.0
        %709 = vmatpush.msra.mxu0 0.0
        %710 = vmatpush.msra.mxu0 0.0
        %711 = vmatpush.msra.mxu0 0.0
        %712 = vmatpush.msra.mxu0 0.0
        %713 = vmatpush.msra.mxu0 0.0
        %714 = vmatpush.msra.mxu0 0.0
        %715 = vmatpush.msra.mxu0 0.0
        %716 = vmatpush.msra.mxu0 0.0
        %717 = vmatpush.msra.mxu0 0.0
        %718 = vmatpush.msra.mxu0 0.0
        %719 = vmatpush.msra.mxu0 0.0
        %720 = vmatpush.msra.mxu0 0.0
        %721 = vmatpush.msra.mxu0 0.0
        %722 = vmatpush.msra.mxu0 %v682
        %723 = vmatmul.f32.gmra.mxu0 %v705
        %v724 = vpop.f32.mrf.mxu0
        %v725 = vadd.f32 0.0, %v724
        %726 = vdwg.mxu0
        %v727 = vperm.slane %v725, 0
        %v728 = vmul.f32 %v704, %v727
        %v729 = vmul.f32 %v517, %v702
        %730 = vmatpush.msra.mxu0 0.0
        %731 = vmatpush.msra.mxu0 0.0
        %732 = vmatpush.msra.mxu0 0.0
        %733 = vmatpush.msra.mxu0 0.0
        %734 = vmatpush.msra.mxu0 0.0
        %735 = vmatpush.msra.mxu0 0.0
        %736 = vmatpush.msra.mxu0 0.0
        %737 = vmatpush.msra.mxu0 0.0
        %738 = vmatpush.msra.mxu0 0.0
        %739 = vmatpush.msra.mxu0 0.0
        %740 = vmatpush.msra.mxu0 0.0
        %741 = vmatpush.msra.mxu0 0.0
        %742 = vmatpush.msra.mxu0 0.0
        %743 = vmatpush.msra.mxu0 0.0
        %744 = vmatpush.msra.mxu0 0.0
        %745 = vmatpush.msra.mxu0 %v729
        %746 = vmatmul.f32.gmra.mxu0 %v653
        %v747 = vpop.f32.mrf.mxu0
        %v748 = vadd.f32 0.0, %v747
        %749 = vdwg.mxu0
        %v750 = vadd.f32 %v728, %v748
        %vm751 = vcmask 523264
        %752 = vst.msk [vmem:[#allocation4] sm:$0xff] %vm751, %v750
        %vm753 = vcmask 8192
        %754 = vst.msk [vmem:[#allocation2] sm:$0x1] %vm753, %v605
        %p755 = scmp.eq.s32.totalorder %s20, 3
        // Predicated region
        $region57: #{tpu_custom_call.1} parent=51 // pred_check
          %p756 = pneg %p755
        $region58: #{tpu_custom_call.1} parent=51 // pred_check_branch
          %758 = sbr.rel (%p756) target = $region60
        $region59: #{tpu_custom_call.1} parent=51 // pred_region
          %v759 = vld [vmem:[%s6 + $0x20] sm:$0xff]
          %v760 = vld [vmem:[%s6 + $0x28] sm:$0xff]
          %v761 = vld [vmem:[%s6 + $0x30] sm:$0xff]
          %v762 = vld [vmem:[%s6 + $0x38] sm:$0xff]
          %v763 = vld [vmem:[#allocation3] sm:$0xff]
          %v765 = vsel %vm567, %v763, 0
          %767 = vmatpush.msra.mxu0 0.0
          %768 = vmatpush.msra.mxu0 0.0
          %769 = vmatpush.msra.mxu0 0.0
          %770 = vmatpush.msra.mxu0 0.0
          %771 = vmatpush.msra.mxu0 0.0
          %772 = vmatpush.msra.mxu0 0.0
          %773 = vmatpush.msra.mxu0 0.0
          %774 = vmatpush.msra.mxu0 0.0
          %775 = vmatpush.msra.mxu0 0.0
          %776 = vmatpush.msra.mxu0 0.0
          %777 = vmatpush.msra.mxu0 0.0
          %778 = vmatpush.msra.mxu0 0.0
          %779 = vmatpush.msra.mxu0 0.0
          %780 = vmatpush.msra.mxu0 0.0
          %781 = vmatpush.msra.mxu0 0.0
          %782 = vmatpush.msra.mxu0 %v682
          %783 = vmatmul.f32.gmra.mxu0 %v765
          %v784 = vpop.f32.mrf.mxu0
          %v785 = vadd.f32 1e-16, %v784
          %786 = vdwg.mxu0
          %v787 = vld [vmem:[#allocation4] sm:$0xff]
          %v788 = vrcp.pop %v785
          %v789 = vmul.f32 %v785, %v788
          %v790 = vsub.f32 1.0, %v789
          %v791 = vmul.f32 %v788, %v790
          %v792 = vadd.f32 %v788, %v791
          %vm793 = vweird.f32 %v785
          %vm794 = vweird.f32 %v788
          %vm795 = vmor %vm793, %vm794
          %v796 = vsel %vm795, %v788, %v792
          %v797 = vand.u32 2147483647, %v785
          %vm798 = vcmp.eq.f32.partialorder %v797, 8.507059e+37
          %v799 = vand.u32 %v785, 2147483648
          %v800 = vor.u32 1.1754944e-38, %v799
          %v801 = vsel %vm798, %v800, %v796
          %v802 = vmul.f32 %v787, %v801
          %vm803 = vcmp.gt.f32.partialorder %v802, 0.0
          %v804 = vmin.f32 %v802, 0.0
          %v805 = vmul.f32 %v804, 1.442695
          %v806 = vpow.pop %v805
          %v807 = vsub.f32 %v806, 1.0
          %v808 = vsel %vm803, %v802, %v807
          %vm809 = vcmp.gt.f32.partialorder %v808, 0.0
          %v810 = vmin.f32 %v808, 0.0
          %v811 = vmul.f32 %v810, 1.442695
          %v812 = vpow.pop %v811
          %v813 = vsub.f32 %v812, 1.0
          %v814 = vsel %vm809, %v808, %v813
          %v816 = vsel %vm751, %v814, 0
          %v819 = vsel %vm751, %v759, 0
          %v822 = vsel %vm751, %v760, 0
          %v825 = vsel %vm751, %v761, 0
          %v828 = vsel %vm751, %v762, 0
          %830 = vmatpush.xpose.msra.mxu0 0.0
          %831 = vmatpush.xpose.msra.mxu0 0.0
          %832 = vmatpush.xpose.msra.mxu0 0.0
          %833 = vmatpush.xpose.msra.mxu0 0.0
          %834 = vmatpush.xpose.msra.mxu0 0.0
          %835 = vmatpush.xpose.msra.mxu0 0.0
          %836 = vmatpush.xpose.msra.mxu0 0.0
          %837 = vmatpush.xpose.msra.mxu0 0.0
          %838 = vmatpush.xpose.msra.mxu0 0.0
          %839 = vmatpush.xpose.msra.mxu0 0.0
          %840 = vmatpush.xpose.msra.mxu0 0.0
          %841 = vmatpush.xpose.msra.mxu0 0.0
          %842 = vmatpush.xpose.msra.mxu0 %v828
          %843 = vmatpush.xpose.msra.mxu0 %v825
          %844 = vmatpush.xpose.msra.mxu0 %v822
          %845 = vmatpush.xpose.msra.mxu0 %v819
          %846 = vmatmul.f32.gmra.mxu0 %v816
          %v847 = vpop.f32.mrf.mxu0
          %v848 = vadd.f32 0.0, %v847
          %849 = vdwg.mxu0
          %850 = vst.msk [vmem:[#allocation6] sm:$0xff] %vm459, %v848
        $region60: #{tpu_custom_call.1} parent=51 // pred_fallthru
          _
        // Predicated region
        $region61: #{tpu_custom_call.1} parent=51 // pred_check
          %p851 = pneg %p211
        $region62: #{tpu_custom_call.1} parent=51 // pred_check_branch
          %853 = sbr.rel (%p851) target = $region64
        $region63: #{tpu_custom_call.1} parent=51 // pred_region
          %855 = vsyncadd [#allocation7], 0
          %s857 = sshll.u32 [#allocation6], 4
          %s858 = int_to_ptr.vmem [resolvable:$true] %s857
          %s859 = sshll.u32 %s8, 4
          %s860 = int_to_ptr.hbm [resolvable:$true] %s859
          %862 = dma.vmem_to_hbm [thread:$0]  %s858, 128, %s860, [#allocation7]
        $region64: #{tpu_custom_call.1} parent=51 // pred_fallthru
          _
        // Predicated region
        $region65: #{tpu_custom_call.1} parent=51 // pred_check
          %p863 = pneg %p211
        $region66: #{tpu_custom_call.1} parent=51 // pred_check_branch
          %865 = sbr.rel (%p863) target = $region68
        $region67: #{tpu_custom_call.1} parent=51 // pred_region
          %867 = dma.done [#allocation7], 128
        $region68: #{tpu_custom_call.1} parent=51 // pred_fallthru
          _
      $region52: #{tpu_custom_call.1} parent=5 // pred_fallthru
        _
      %p868 = scmp.le.s32.totalorder 2, %s15
      // Predicated region
      $region69: #{tpu_custom_call.1} parent=5 // pred_check
        %p869 = pneg %p868
      $region70: #{tpu_custom_call.1} parent=5 // pred_check_branch
        %871 = sbr.rel (%p869) target = $region72
      $region71: #{tpu_custom_call.1} parent=5 // pred_region
        %s872 = ssub.s32 %s15, 2
      $region72: #{tpu_custom_call.1} parent=5 // pred_fallthru
        _
    $region6: #{tpu_custom_call.1} parent=1 // loop_footer
      %s19 = sadd.s32 1, %s15
    $region7: #{tpu_custom_call.1} parent=1 // loop_footer_branch
      %14 = sbr.rel target = $region3
    $region8: #{tpu_custom_call.1} parent=1 // loop_exit
      _
    %873 = vsyncpa [#allocation7], 1
    %s874 = scalar_lea.sflag [#allocation7], 1
    %875 = vsyncpa %s874, 1

</llo_original>
